<compile_context>
chip_gen: v7x
topology: tpu7x:2x2x1
jax: 0.10.0
libtpu: 0.0.40
codegen_flags: <defaults>
</compile_context>

<pallas_src>
import functools

import jax
import jax.numpy as jnp
from jax.experimental import pallas as pl
from jax.experimental.pallas import tpu as pltpu

NEG_INF = float("-inf")


def _mac_kernel(x_ref, o_ref, acc_ref, *, t_col, hw, mask_cols):
    """Row-wise max reduction over the spatial axis.

    x_ref:   [TR, TCOL] tile of the [B*C, H*W] input
    o_ref:   [TR, 1]    output block (resident across the reduction axis)
    acc_ref: [TR, 128]  running-max scratch (f32)
    """
    j = pl.program_id(1)

    @pl.when(j == 0)
    def _init():
        acc_ref[...] = jnp.full(acc_ref.shape, NEG_INF, dtype=acc_ref.dtype)

    x = x_ref[...].astype(jnp.float32)  # [TR, TCOL]

    if mask_cols:
        # Ragged last spatial tile: neutralize out-of-bounds columns for the max.
        col = j * t_col + jax.lax.broadcasted_iota(jnp.int32, x.shape, 1)
        x = jnp.where(col < hw, x, NEG_INF)

    if t_col % 128 == 0:
        # VPU-only accumulation: elementwise max across 128-lane column slabs.
        m = x[:, 0:128]
        for s in range(1, t_col // 128):
            m = jnp.maximum(m, x[:, s * 128:(s + 1) * 128])
    else:
        # Narrow spatial extent (< 128 lanes): single cross-lane reduce,
        # broadcast against the [TR, 128] accumulator.
        m = jnp.max(x, axis=-1, keepdims=True)

    acc_ref[...] = jnp.maximum(acc_ref[...], m)

    @pl.when(j == pl.num_programs(1) - 1)
    def _finalize():
        o_ref[...] = jnp.max(acc_ref[...], axis=-1, keepdims=True).astype(o_ref.dtype)


def mac_forward(x_nchw, *, row_tile_cap=256, col_tile_cap=2048):
    """x_nchw: [B, C, H, W]. Returns adaptive_max_pool2d(x, (1,1)) -> [B, C, 1, 1]."""
    B, C, H, W = x_nchw.shape
    R, HW = B * C, H * W

    # Free reshape: NCHW is already contiguous as (B*C, H*W). No HBM transpose.
    x2d = x_nchw.reshape(R, HW)

    # Row tile: full extent if small, else a multiple-of-8 cap (ragged tail is fine:
    # OOB output rows are masked on writeback).
    TR = R if R <= row_tile_cap else row_tile_cap
    # Column tile: multiple of 128 (lane-aligned) when possible, else full extent.
    if HW < 128:
        TCOL = HW
    else:
        TCOL = min(col_tile_cap, (HW // 128) * 128)
    mask_cols = (HW % TCOL) != 0

    grid = (pl.cdiv(R, TR), pl.cdiv(HW, TCOL))

    out = pl.pallas_call(
        functools.partial(_mac_kernel, t_col=TCOL, hw=HW, mask_cols=mask_cols),
        out_shape=jax.ShapeDtypeStruct((R, 1), x_nchw.dtype),
        grid_spec=pltpu.PrefetchScalarGridSpec(
            num_scalar_prefetch=0,
            grid=grid,
            in_specs=[pl.BlockSpec((TR, TCOL), lambda i, j: (i, j))],
            out_specs=pl.BlockSpec((TR, 1), lambda i, j: (i, 0)),
            scratch_shapes=[pltpu.VMEM((TR, 128), jnp.float32)],
        ),
        compiler_params=pltpu.CompilerParams(
            dimension_semantics=("parallel", "arbitrary"),
            vmem_limit_bytes=32 * 1024 * 1024,
        ),
    )(x2d)

    return out.reshape(B, C, 1, 1)


def mac_reference(x_nchw):
    """Pure-JAX reference mirroring F.adaptive_max_pool2d(x, (1, 1))."""
    return jnp.max(x_nchw, axis=(2, 3), keepdims=True)


if __name__ == "__main__":
    B, C, H, W = 2, 4, 16, 16
    key = jax.random.PRNGKey(0)
    x = jax.random.normal(key, (B, C, H, W), jnp.float32)

    out = mac_forward(x)
    out = jax.block_until_ready(out)

    ref = mac_reference(x)
    assert out.shape == (B, C, 1, 1), out.shape
    assert jnp.allclose(out, ref, atol=0.0, rtol=0.0), "kernel/reference mismatch"
    print("KERNEL_OK")
</pallas_src>

<mosaic_0001>
module attributes {stable_mosaic.version = 11 : i64} {
  func.func @_mac_kernel(%arg0: i32, %arg1: i32, %arg2: memref<8x256xf32, #tpu.memory_space<vmem>>, %arg3: memref<8x1xf32, #tpu.memory_space<vmem>>, %arg4: memref<8x128xf32, #tpu.memory_space<vmem>>) attributes {dimension_semantics = [#tpu.dimension_semantics<parallel>, #tpu.dimension_semantics<arbitrary>], iteration_bounds = array<i64: 1, 1>, scalar_prefetch = 0 : i64, scratch_operands = 1 : i64, tpu.core_type = #tpu.core_type<tc>, window_params = [{transform_indices = @transform_0, window_bounds = array<i64: 8, 256>}, {transform_indices = @transform_1, window_bounds = array<i64: 8, 1>}]} {
    %c0_i32 = arith.constant 0 : i32
    %0 = arith.cmpi eq, %arg1, %c0_i32 : i32
    %1 = arith.extui %0 : i1 to i32
    %c0_i32_0 = arith.constant 0 : i32
    %2 = arith.cmpi ne, %1, %c0_i32_0 : i32
    scf.if %2 {
      %cst = arith.constant 0xFF800000 : f32
      %13 = vector.broadcast %cst : f32 to vector<8x128xf32>
      %c0_8 = arith.constant 0 : index
      %c0_9 = arith.constant 0 : index
      %14 = vector.load %arg4[%c0_8, %c0_9] : memref<8x128xf32, #tpu.memory_space<vmem>>, vector<8x128xf32>
      tpu.vector_store %arg4[%c0_8, %c0_9], %13 {strides = array<i32>} : memref<8x128xf32, #tpu.memory_space<vmem>>, vector<8x128xf32>,
    } else {
    }
    %c0 = arith.constant 0 : index
    %c0_1 = arith.constant 0 : index
    %3 = vector.load %arg2[%c0, %c0_1] : memref<8x256xf32, #tpu.memory_space<vmem>>, vector<8x256xf32>
    %4 = vector.extract_strided_slice %3 {offsets = [0, 0], sizes = [8, 128], strides = [1, 1]} : vector<8x256xf32> to vector<8x128xf32>
    %5 = vector.extract_strided_slice %3 {offsets = [0, 128], sizes = [8, 128], strides = [1, 1]} : vector<8x256xf32> to vector<8x128xf32>
    %6 = arith.maximumf %4, %5 : vector<8x128xf32>
    %c0_2 = arith.constant 0 : index
    %c0_3 = arith.constant 0 : index
    %7 = vector.load %arg4[%c0_2, %c0_3] : memref<8x128xf32, #tpu.memory_space<vmem>>, vector<8x128xf32>
    %8 = arith.maximumf %7, %6 : vector<8x128xf32>
    %c0_4 = arith.constant 0 : index
    %c0_5 = arith.constant 0 : index
    %9 = vector.load %arg4[%c0_4, %c0_5] : memref<8x128xf32, #tpu.memory_space<vmem>>, vector<8x128xf32>
    tpu.vector_store %arg4[%c0_4, %c0_5], %8 {strides = array<i32>} : memref<8x128xf32, #tpu.memory_space<vmem>>, vector<8x128xf32>,
    %c0_i32_6 = arith.constant 0 : i32
    %10 = arith.cmpi eq, %arg1, %c0_i32_6 : i32
    %11 = arith.extui %10 : i1 to i32
    %c0_i32_7 = arith.constant 0 : i32
    %12 = arith.cmpi ne, %11, %c0_i32_7 : i32
    scf.if %12 {
      %c0_8 = arith.constant 0 : index
      %c0_9 = arith.constant 0 : index
      %13 = vector.load %arg4[%c0_8, %c0_9] : memref<8x128xf32, #tpu.memory_space<vmem>>, vector<8x128xf32>
      %cst = arith.constant dense<0xFF800000> : vector<8xf32>
      %14 = vector.multi_reduction <maximumf>, %13, %cst [1] : vector<8x128xf32> to vector<8xf32>
      %15 = vector.shape_cast %14 : vector<8xf32> to vector<8x1xf32>
      %c0_10 = arith.constant 0 : index
      %c0_11 = arith.constant 0 : index
      %16 = vector.load %arg3[%c0_10, %c0_11] : memref<8x1xf32, #tpu.memory_space<vmem>>, vector<8x1xf32>
      tpu.vector_store %arg3[%c0_10, %c0_11], %15 {strides = array<i32>} : memref<8x1xf32, #tpu.memory_space<vmem>>, vector<8x1xf32>,
    } else {
    }
    return
  }
  func.func @transform_0(%arg0: i32, %arg1: i32) -> (i32, i32) {
    %c0_i32 = arith.constant 0 : i32
    return %arg0, %arg1 : i32, i32
  }
  func.func @transform_1(%arg0: i32, %arg1: i32) -> (i32, i32) {
    %c0_i32 = arith.constant 0 : i32
    %c0_i32_0 = arith.constant 0 : i32
    return %arg0, %c0_i32 : i32, i32
  }
}

</mosaic_0001>

<llo_original>
// kernel: tpu_custom_call.1
$region0: #{tpu_custom_call.1}
  #allocation0 [shape = 'u32[]', space=smem, size = 0x4, offset = 0x4, fixed_abs, tag = 'smem constant byte address 0x4 - core index']
  #allocation1 [shape = 'u32[144,128]{1,0:T(1,128)}', space=vmem, size = 0x12000, scoped, tag = 'internal scratch']
  #allocation2 [shape = 'f32[8,128]{1,0:T(8,128)}', space=vmem, size = 0x1000, scoped, tag = 'scratch operand']
  %s0 = inlined_call_operand.hbm [shape: f32[8,256], index: 0, kind: input, shape index: {}]
  %s1 = inlined_call_operand.vmem [shape: f32[8,1], index: 1, kind: output, shape index: {}]
  %s2 = sld [smem:[#allocation0]]
  $region26: #{tpu_custom_call.1} parent=0
    _
  %s4 = ssub.s32 1, %s2
  %s5 = scalar_select 0, %s4, %s2
  $region1: #{tpu_custom_call.1} parent=0
    #allocation3 [shape = 'u8[8192]{0}', space=vmem, size = 0x2000, scoped, tag = 'input window, operand 0, single buffered']
    #allocation4 [shape = 's32[1]{0}', space=sflag, size = 0x4, scoped, tag = 'scoped memory for tpu_custom_call.1']
    %6 = vsyncpa [#allocation4], 0
    // Predicated region
    $region2: #{tpu_custom_call.1} parent=1 // pred_check
      _
    $region3: #{tpu_custom_call.1} parent=1 // pred_check_branch
      %8 = sbr.rel (0) target = $region5
    $region4: #{tpu_custom_call.1} parent=1 // pred_region
      %s10 = ssub.s32 256, 256
      %11 = vsyncadd [#allocation4], %s10
      %s13 = sshll.u32 [#allocation3], 4
      %s14 = int_to_ptr.vmem [resolvable:$true] %s13
      %16 = dma.hbm_to_vmem [thread:$0]  %s0, 256, %s14, [#allocation4]
    $region5: #{tpu_custom_call.1} parent=1 // pred_fallthru
      _
    // Predicated region
    $region6: #{tpu_custom_call.1} parent=1 // pred_check
      _
    $region7: #{tpu_custom_call.1} parent=1 // pred_check_branch
      %18 = sbr.rel (0) target = $region9
    $region8: #{tpu_custom_call.1} parent=1 // pred_region
      %19 = dma.done [#allocation4], 256
    $region9: #{tpu_custom_call.1} parent=1 // pred_fallthru
      _
    %p20 = scmp.eq.s32.totalorder 0, 0
    // Predicated region
    $region10: #{tpu_custom_call.1} parent=1 // pred_check
      %p21 = pneg %p20
    $region11: #{tpu_custom_call.1} parent=1 // pred_check_branch
      %23 = sbr.rel (%p21) target = $region13
    $region12: #{tpu_custom_call.1} parent=1 // pred_region
      %24 = vst [vmem:[#allocation2] sm:$0xff] -inf
    $region13: #{tpu_custom_call.1} parent=1 // pred_fallthru
      _
    %v25 = vld [vmem:[#allocation3] sm:$0xff]
    %v26 = vld [vmem:[#allocation3 + $0x8] sm:$0xff]
    %v27 = vmax.f32 %v25, %v26
    %v28 = vld [vmem:[#allocation2] sm:$0xff]
    %v29 = vmax.f32 %v28, %v27
    %30 = vst [vmem:[#allocation2] sm:$0xff] %v29
    // Predicated region
    $region14: #{tpu_custom_call.1} parent=1 // pred_check
      %p31 = pneg %p20
    $region15: #{tpu_custom_call.1} parent=1 // pred_check_branch
      %33 = sbr.rel (%p31) target = $region17
    $region16: #{tpu_custom_call.1} parent=1 // pred_region
      %v34 = vld [vmem:[#allocation2] sm:$0xff]
      %35 = vmax.xlane.f32.xlu0 %v34
      %v36 = vpop.xlane.xlu0 %35
      %vm37 = vcmask 7168
      %38 = vst.msk [vmem:[%s1] sm:$0xff] %vm37, %v36
    $region17: #{tpu_custom_call.1} parent=1 // pred_fallthru
      _
    // Predicated region
    $region18: #{tpu_custom_call.1} parent=1 // pred_check
      _
    $region19: #{tpu_custom_call.1} parent=1 // pred_check_branch
      %40 = sbr.rel (0) target = $region21
    $region20: #{tpu_custom_call.1} parent=1 // pred_region
      _
    $region21: #{tpu_custom_call.1} parent=1 // pred_fallthru
      _
    // Predicated region
    $region22: #{tpu_custom_call.1} parent=1 // pred_check
      _
    $region23: #{tpu_custom_call.1} parent=1 // pred_check_branch
      %42 = sbr.rel (0) target = $region25
    $region24: #{tpu_custom_call.1} parent=1 // pred_region
      _
    $region25: #{tpu_custom_call.1} parent=1 // pred_fallthru
      _
    %43 = vsyncpa [#allocation4], 1

</llo_original>
